<compile_context>
chip_gen: v5e
topology: v5e:2x2
jax: 0.10.0
libtpu: 0.0.40
codegen_flags: <defaults>
</compile_context>

<pallas_src>
import functools

import jax
import jax.numpy as jnp
from jax.experimental import pallas as pl
from jax.experimental.pallas import tpu as pltpu

_EPS = 1e-5
_MLP_OUT = 7          # true mlp_head output width
_MLP_PAD = 128        # lane-dense padded width for the mlp head
_PRO_OUT = 256        # pro_head output width (already lane-dense)

# Row layout of the packed (6, D) small-vector array.
_ROW_GSPA, _ROW_BSPA, _ROW_GSPE, _ROW_BSPE, _ROW_B1M, _ROW_B1P = range(6)


def _bn_train(x, gamma, beta):
    """Training-mode BatchNorm1d folded to centered scale/shift.

    x: (B, D); gamma/beta: (1, D). Biased variance, eps=1e-5 (PyTorch default).
    """
    mu = jnp.mean(x, axis=0, keepdims=True)
    xc = x - mu                                   # reused for var and apply
    var = jnp.mean(xc * xc, axis=0, keepdims=True)
    scale = jax.lax.rsqrt(var + _EPS) * gamma     # rsqrt -> EUP slot
    return xc * scale + beta                      # 2 VPU ops / element


def _make_kernel(with_pro: bool):
    def kernel(spa_ref, spe_ref, vecs_ref, b2_ref, w1m_ref, w2m_ref, *rest):
        if with_pro:
            w1p_ref, w2p_ref, out_ref = rest
        else:
            (out_ref,) = rest

        spa = spa_ref[...]                         # (B, D) mid row (pre-sliced)
        spe = spe_ref[...]                         # (B, D) mean   (pre-reduced)

        vecs = vecs_ref[...]                       # (6, D) packed small params
        spa_n = _bn_train(spa, vecs[_ROW_GSPA:_ROW_GSPA + 1, :],
                          vecs[_ROW_BSPA:_ROW_BSPA + 1, :])
        spe_n = _bn_train(spe, vecs[_ROW_GSPE:_ROW_GSPE + 1, :],
                          vecs[_ROW_BSPE:_ROW_BSPE + 1, :])
        result = spa_n + spe_n                     # (B, D); to_latent = Identity

        # mlp_head: Linear(D,D) -> ReLU -> Dropout(0) -> Linear(D,7 padded->128)
        h_mlp = jnp.dot(result, w1m_ref[...],
                        preferred_element_type=jnp.float32)
        h_mlp = jnp.maximum(h_mlp + vecs[_ROW_B1M:_ROW_B1M + 1, :], 0.0)
        out_ref[:, 0:_MLP_PAD] = (
            jnp.dot(h_mlp, w2m_ref[...], preferred_element_type=jnp.float32)
            + b2_ref[:, 0:_MLP_PAD])               # 128-aligned, unmasked vst

        if with_pro:
            # pro_head: Linear(D,D) -> ReLU -> Dropout(0) -> Linear(D,256)
            h_pro = jnp.dot(result, w1p_ref[...],
                            preferred_element_type=jnp.float32)
            h_pro = jnp.maximum(h_pro + vecs[_ROW_B1P:_ROW_B1P + 1, :], 0.0)
            out_ref[:, _MLP_PAD:_MLP_PAD + _PRO_OUT] = (
                jnp.dot(h_pro, w2p_ref[...], preferred_element_type=jnp.float32)
                + b2_ref[:, _MLP_PAD:_MLP_PAD + _PRO_OUT])

    return kernel


def prepare_params(params):
    """One-time packing/padding of raw module params (run once per weight set,
    NOT per forward call)."""
    vecs = jnp.concatenate(
        [params["gamma_spa"], params["beta_spa"],
         params["gamma_spe"], params["beta_spe"],
         params["mlp_b1"], params["pro_b1"]], axis=0)          # (6, D)
    b2 = jnp.concatenate(
        [jnp.pad(params["mlp_b2"], ((0, 0), (0, _MLP_PAD - _MLP_OUT))),
         params["pro_b2"]], axis=1)                             # (1, 384)
    w2m = jnp.pad(params["mlp_w2"],
                  ((0, 0), (0, _MLP_PAD - _MLP_OUT)))           # (D, 128)
    return {
        "vecs": vecs,
        "b2": b2,
        "mlp_w1": params["mlp_w1"],
        "mlp_w2_pad": w2m,
        "pro_w1": params["pro_w1"],
        "pro_w2": params["pro_w2"],
    }


@functools.partial(jax.jit, static_argnames=("end",))
def ss_linear_block_forward(spa_token, spe_token, prepped, *, end=0):
    """Pallas implementation of ss_linear_block.forward.

    spa_token: (B, S_spa, D) float32
    spe_token: (B, S_spe, D) float32
    prepped:   output of prepare_params(params)
    Returns (B, 7) if end == 0, else ((B, 7), (B, 256)).
    """
    B, S_spa, D = spa_token.shape
    with_pro = end != 0

    # Exactly matches PyTorch: spa_token[:, spa_token.size(1) // 2 + 1, :].
    mid = S_spa // 2 + 1
    spa_mid = spa_token[:, mid, :]
    # spe_token.mean(dim=1) done here so only (B, D) ever enters VMEM; XLA can
    # overlap this tiny reduce with the kernel's weight DMA.
    spe_mean = jnp.mean(spe_token, axis=1)

    inputs = [spa_mid, spe_mean, prepped["vecs"], prepped["b2"],
              prepped["mlp_w1"], prepped["mlp_w2_pad"]]
    if with_pro:
        inputs += [prepped["pro_w1"], prepped["pro_w2"]]
        out_width = _MLP_PAD + _PRO_OUT
    else:
        out_width = _MLP_PAD

    out_shape = jax.ShapeDtypeStruct((B, out_width), jnp.float32)

    # Advisory cost estimate so XLA can overlap this tiny call.
    flops = 2 * B * D * D + 2 * B * D * _MLP_PAD
    if with_pro:
        flops += 2 * B * D * D + 2 * B * D * _PRO_OUT
    bytes_accessed = sum(int(a.size) * a.dtype.itemsize for a in inputs)
    bytes_accessed += B * out_width * 4
    cost = pl.CostEstimate(flops=flops, transcendentals=2 * D,
                           bytes_accessed=bytes_accessed)

    vmem = pl.BlockSpec(memory_space=pltpu.MemorySpace.VMEM)
    fn = pl.pallas_call(
        _make_kernel(with_pro),
        out_shape=out_shape,
        in_specs=[vmem] * len(inputs),
        out_specs=vmem,
        cost_estimate=cost,
    )
    out = fn(*inputs)

    if with_pro:
        return out[:, :_MLP_OUT], out[:, _MLP_PAD:_MLP_PAD + _PRO_OUT]
    return out[:, :_MLP_OUT]


def init_params(key, d_model):
    """Deterministic synthetic parameter init (shapes per module __init__)."""
    ks = jax.random.split(key, 8)
    scale = 1.0 / jnp.sqrt(jnp.float32(d_model))
    params = {
        # BatchNorm1d affine params (perturbed so the affine path is exercised).
        "gamma_spa": 1.0 + 0.1 * jax.random.normal(ks[0], (1, d_model), jnp.float32),
        "beta_spa": 0.1 * jax.random.normal(ks[1], (1, d_model), jnp.float32),
        "gamma_spe": 1.0 + 0.1 * jax.random.normal(ks[2], (1, d_model), jnp.float32),
        "beta_spe": 0.1 * jax.random.normal(ks[3], (1, d_model), jnp.float32),
        # mlp_head: Linear(d, d), Linear(d, 7)  (stored as (in, out))
        "mlp_w1": scale * jax.random.normal(ks[4], (d_model, d_model), jnp.float32),
        "mlp_b1": jnp.zeros((1, d_model), jnp.float32),
        "mlp_w2": scale * jax.random.normal(ks[5], (d_model, _MLP_OUT), jnp.float32),
        "mlp_b2": jnp.zeros((1, _MLP_OUT), jnp.float32),
        # pro_head: Linear(d, d), Linear(d, 256)
        "pro_w1": scale * jax.random.normal(ks[6], (d_model, d_model), jnp.float32),
        "pro_b1": jnp.zeros((1, d_model), jnp.float32),
        "pro_w2": scale * jax.random.normal(ks[7], (d_model, _PRO_OUT), jnp.float32),
        "pro_b2": jnp.zeros((1, _PRO_OUT), jnp.float32),
    }
    return params


def _reference(spa_token, spe_token, params, end=0):
    """Pure-JAX reference mirroring the PyTorch forward (train-mode BN)."""
    def bn(x, gamma, beta):
        mu = jnp.mean(x, axis=0, keepdims=True)
        var = jnp.mean((x - mu) ** 2, axis=0, keepdims=True)
        return (x - mu) * jax.lax.rsqrt(var + _EPS) * gamma + beta

    mid = spa_token.shape[1] // 2 + 1
    spa = bn(spa_token[:, mid, :], params["gamma_spa"], params["beta_spa"])
    spe = bn(spe_token.mean(axis=1), params["gamma_spe"], params["beta_spe"])
    result = spa + spe
    h = jnp.maximum(result @ params["mlp_w1"] + params["mlp_b1"], 0.0)
    mlp = h @ params["mlp_w2"] + params["mlp_b2"]
    if end == 0:
        return mlp
    ph = jnp.maximum(result @ params["pro_w1"] + params["pro_b1"], 0.0)
    pro = ph @ params["pro_w2"] + params["pro_b2"]
    return mlp, pro


if __name__ == "__main__":
    key = jax.random.PRNGKey(0)
    k_spa, k_spe, k_param = jax.random.split(key, 3)

    B, S_spa, S_spe, d_model = 4, 9, 8, 32
    spa_token = jax.random.normal(k_spa, (B, S_spa, d_model), jnp.float32)
    spe_token = jax.random.normal(k_spe, (B, S_spe, d_model), jnp.float32)
    params = init_params(k_param, d_model)
    prepped = prepare_params(params)   # one-time packing, outside the forward

    # end = 0 path (single head)
    out0 = ss_linear_block_forward(spa_token, spe_token, prepped, end=0)
    out0 = jax.block_until_ready(out0)
    ref0 = _reference(spa_token, spe_token, params, end=0)
    assert out0.shape == (B, 7)
    assert jnp.allclose(out0, ref0, atol=1e-4, rtol=1e-4)

    # end != 0 path (mlp_head + pro_head)
    out1_mlp, out1_pro = ss_linear_block_forward(spa_token, spe_token, prepped, end=1)
    out1_mlp = jax.block_until_ready(out1_mlp)
    out1_pro = jax.block_until_ready(out1_pro)
    ref1_mlp, ref1_pro = _reference(spa_token, spe_token, params, end=1)
    assert out1_mlp.shape == (B, 7) and out1_pro.shape == (B, _PRO_OUT)
    assert jnp.allclose(out1_mlp, ref1_mlp, atol=1e-4, rtol=1e-4)
    assert jnp.allclose(out1_pro, ref1_pro, atol=1e-4, rtol=1e-4)

    print("KERNEL_OK")
</pallas_src>

<mosaic_0001>
module attributes {stable_mosaic.version = 11 : i64} {
  func.func @kernel(%arg0: memref<4x32xf32, #tpu.memory_space<vmem>>, %arg1: memref<4x32xf32, #tpu.memory_space<vmem>>, %arg2: memref<6x32xf32, #tpu.memory_space<vmem>>, %arg3: memref<1x384xf32, #tpu.memory_space<vmem>>, %arg4: memref<32x32xf32, #tpu.memory_space<vmem>>, %arg5: memref<32x128xf32, #tpu.memory_space<vmem>>, %arg6: memref<4x128xf32, #tpu.memory_space<vmem>>) attributes {dimension_semantics = [], scalar_prefetch = 0 : i64, scratch_operands = 0 : i64, tpu.core_type = #tpu.core_type<tc>} {
    %c0 = arith.constant 0 : index
    %c0_0 = arith.constant 0 : index
    %0 = vector.load %arg0[%c0, %c0_0] : memref<4x32xf32, #tpu.memory_space<vmem>>, vector<4x32xf32>
    %c0_1 = arith.constant 0 : index
    %c0_2 = arith.constant 0 : index
    %1 = vector.load %arg1[%c0_1, %c0_2] : memref<4x32xf32, #tpu.memory_space<vmem>>, vector<4x32xf32>
    %c0_3 = arith.constant 0 : index
    %c0_4 = arith.constant 0 : index
    %2 = vector.load %arg2[%c0_3, %c0_4] : memref<6x32xf32, #tpu.memory_space<vmem>>, vector<6x32xf32>
    %3 = vector.extract_strided_slice %2 {offsets = [0, 0], sizes = [1, 32], strides = [1, 1]} : vector<6x32xf32> to vector<1x32xf32>
    %4 = vector.extract_strided_slice %2 {offsets = [1, 0], sizes = [1, 32], strides = [1, 1]} : vector<6x32xf32> to vector<1x32xf32>
    %cst = arith.constant dense<0.000000e+00> : vector<32xf32>
    %5 = vector.multi_reduction <add>, %0, %cst [0] : vector<4x32xf32> to vector<32xf32>
    %6 = vector.shape_cast %5 : vector<32xf32> to vector<1x32xf32>
    %cst_5 = arith.constant 4.000000e+00 : f32
    %7 = vector.broadcast %cst_5 : f32 to vector<1x32xf32>
    %8 = arith.divf %6, %7 : vector<1x32xf32>
    %9 = vector.broadcast %8 : vector<1x32xf32> to vector<4x32xf32>
    %10 = arith.subf %0, %9 : vector<4x32xf32>
    %11 = arith.mulf %10, %10 : vector<4x32xf32>
    %cst_6 = arith.constant dense<0.000000e+00> : vector<32xf32>
    %12 = vector.multi_reduction <add>, %11, %cst_6 [0] : vector<4x32xf32> to vector<32xf32>
    %13 = vector.shape_cast %12 : vector<32xf32> to vector<1x32xf32>
    %cst_7 = arith.constant 4.000000e+00 : f32
    %14 = vector.broadcast %cst_7 : f32 to vector<1x32xf32>
    %15 = arith.divf %13, %14 : vector<1x32xf32>
    %cst_8 = arith.constant 9.99999974E-6 : f32
    %16 = vector.broadcast %cst_8 : f32 to vector<1x32xf32>
    %17 = arith.addf %15, %16 : vector<1x32xf32>
    %18 = math.rsqrt %17 : vector<1x32xf32>
    %19 = arith.mulf %18, %3 : vector<1x32xf32>
    %20 = vector.broadcast %19 : vector<1x32xf32> to vector<4x32xf32>
    %21 = arith.mulf %10, %20 : vector<4x32xf32>
    %22 = vector.broadcast %4 : vector<1x32xf32> to vector<4x32xf32>
    %23 = arith.addf %21, %22 : vector<4x32xf32>
    %24 = vector.extract_strided_slice %2 {offsets = [2, 0], sizes = [1, 32], strides = [1, 1]} : vector<6x32xf32> to vector<1x32xf32>
    %25 = vector.extract_strided_slice %2 {offsets = [3, 0], sizes = [1, 32], strides = [1, 1]} : vector<6x32xf32> to vector<1x32xf32>
    %cst_9 = arith.constant dense<0.000000e+00> : vector<32xf32>
    %26 = vector.multi_reduction <add>, %1, %cst_9 [0] : vector<4x32xf32> to vector<32xf32>
    %27 = vector.shape_cast %26 : vector<32xf32> to vector<1x32xf32>
    %cst_10 = arith.constant 4.000000e+00 : f32
    %28 = vector.broadcast %cst_10 : f32 to vector<1x32xf32>
    %29 = arith.divf %27, %28 : vector<1x32xf32>
    %30 = vector.broadcast %29 : vector<1x32xf32> to vector<4x32xf32>
    %31 = arith.subf %1, %30 : vector<4x32xf32>
    %32 = arith.mulf %31, %31 : vector<4x32xf32>
    %cst_11 = arith.constant dense<0.000000e+00> : vector<32xf32>
    %33 = vector.multi_reduction <add>, %32, %cst_11 [0] : vector<4x32xf32> to vector<32xf32>
    %34 = vector.shape_cast %33 : vector<32xf32> to vector<1x32xf32>
    %cst_12 = arith.constant 4.000000e+00 : f32
    %35 = vector.broadcast %cst_12 : f32 to vector<1x32xf32>
    %36 = arith.divf %34, %35 : vector<1x32xf32>
    %cst_13 = arith.constant 9.99999974E-6 : f32
    %37 = vector.broadcast %cst_13 : f32 to vector<1x32xf32>
    %38 = arith.addf %36, %37 : vector<1x32xf32>
    %39 = math.rsqrt %38 : vector<1x32xf32>
    %40 = arith.mulf %39, %24 : vector<1x32xf32>
    %41 = vector.broadcast %40 : vector<1x32xf32> to vector<4x32xf32>
    %42 = arith.mulf %31, %41 : vector<4x32xf32>
    %43 = vector.broadcast %25 : vector<1x32xf32> to vector<4x32xf32>
    %44 = arith.addf %42, %43 : vector<4x32xf32>
    %45 = arith.addf %23, %44 : vector<4x32xf32>
    %c0_14 = arith.constant 0 : index
    %c0_15 = arith.constant 0 : index
    %46 = vector.load %arg4[%c0_14, %c0_15] : memref<32x32xf32, #tpu.memory_space<vmem>>, vector<32x32xf32>
    %cst_16 = arith.constant dense<0.000000e+00> : vector<4x32xf32>
    %47 = tpu.matmul %45, %46, %cst_16 {dimension_numbers = #tpu.dot_dimension_numbers<[1], [0], [0], [1], [0, 0, 1, 1], [], []>} : vector<4x32xf32>, vector<32x32xf32>, vector<4x32xf32> -> vector<4x32xf32>
    %48 = vector.extract_strided_slice %2 {offsets = [4, 0], sizes = [1, 32], strides = [1, 1]} : vector<6x32xf32> to vector<1x32xf32>
    %49 = vector.broadcast %48 : vector<1x32xf32> to vector<4x32xf32>
    %50 = arith.addf %47, %49 : vector<4x32xf32>
    %cst_17 = arith.constant 0.000000e+00 : f32
    %51 = vector.broadcast %cst_17 : f32 to vector<4x32xf32>
    %52 = arith.maximumf %50, %51 : vector<4x32xf32>
    %c0_18 = arith.constant 0 : index
    %c0_19 = arith.constant 0 : index
    %53 = vector.load %arg5[%c0_18, %c0_19] : memref<32x128xf32, #tpu.memory_space<vmem>>, vector<32x128xf32>
    %cst_20 = arith.constant dense<0.000000e+00> : vector<4x128xf32>
    %54 = tpu.matmul %52, %53, %cst_20 {dimension_numbers = #tpu.dot_dimension_numbers<[1], [0], [0], [1], [0, 0, 1, 1], [], []>} : vector<4x32xf32>, vector<32x128xf32>, vector<4x128xf32> -> vector<4x128xf32>
    %c0_21 = arith.constant 0 : index
    %c0_22 = arith.constant 0 : index
    %55 = vector.load %arg3[%c0_21, %c0_22] : memref<1x384xf32, #tpu.memory_space<vmem>>, vector<1x128xf32>
    %56 = vector.broadcast %55 : vector<1x128xf32> to vector<4x128xf32>
    %57 = arith.addf %54, %56 : vector<4x128xf32>
    %c0_23 = arith.constant 0 : index
    %c0_24 = arith.constant 0 : index
    %58 = vector.load %arg6[%c0_23, %c0_24] : memref<4x128xf32, #tpu.memory_space<vmem>>, vector<4x128xf32>
    tpu.vector_store %arg6[%c0_23, %c0_24], %57 {strides = array<i32>} : memref<4x128xf32, #tpu.memory_space<vmem>>, vector<4x128xf32>,
    return
  }
}

</mosaic_0001>

<llo_original>
// kernel: ss_linear_block_forward.1
$region0: #{ss_linear_block_forward.1}
  #allocation0 [shape = 'u32[]', space=smem, size = 0x4, offset = 0x4, fixed_abs, tag = 'smem constant byte address 0x4 - core index']
  #allocation1 [shape = 'u32[72,128]{1,0:T(1,128)}', space=vmem, size = 0x9000, scoped, tag = 'internal scratch']
  %s0 = inlined_call_operand.vmem [shape: f32[4,32], index: 0, kind: input, shape index: {}]
  %s1 = inlined_call_operand.vmem [shape: f32[4,32], index: 1, kind: input, shape index: {}]
  %s2 = inlined_call_operand.vmem [shape: f32[6,32], index: 2, kind: input, shape index: {}]
  %s3 = inlined_call_operand.vmem [shape: f32[1,384], index: 3, kind: input, shape index: {}]
  %s4 = inlined_call_operand.vmem [shape: f32[32,32], index: 4, kind: input, shape index: {}]
  %s5 = inlined_call_operand.hbm [shape: f32[32,128], index: 5, kind: input, shape index: {}]
  %s6 = inlined_call_operand.hbm [shape: f32[4,128], index: 6, kind: output, shape index: {}]
  %s7 = sld [smem:[#allocation0]]
  $region38: #{ss_linear_block_forward.1} parent=0
    _
  %s9 = ssub.s32 1, %s7
  %s10 = scalar_select 0, %s9, %s7
  $region1: #{ss_linear_block_forward.1} parent=0
    #allocation2 [shape = 'u8[16384]{0}', space=vmem, size = 0x4000, scoped, tag = 'input window, operand 5, single buffered']
    #allocation3 [shape = 's32[1]{0}', space=sflag, size = 0x4, scoped, tag = 'scoped memory for ss_linear_block_forward.1']
    #allocation4 [shape = 's32[1]{0}', space=sflag, size = 0x4, scoped, tag = 'scoped memory for ss_linear_block_forward.1']
    #allocation5 [shape = 'u8[2048]{0}', space=vmem, size = 0x800, scoped, tag = 'output window, operand 0, single buffered']
    %11 = vsyncpa [#allocation3], 0
    %12 = vsyncpa [#allocation4], 0
    // Predicated region
    $region2: #{ss_linear_block_forward.1} parent=1 // pred_check
      _
    $region3: #{ss_linear_block_forward.1} parent=1 // pred_check_branch
      %14 = sbr.rel (0) target = $region5
    $region4: #{ss_linear_block_forward.1} parent=1 // pred_region
      _
    $region5: #{ss_linear_block_forward.1} parent=1 // pred_fallthru
      _
    // Predicated region
    $region6: #{ss_linear_block_forward.1} parent=1 // pred_check
      _
    $region7: #{ss_linear_block_forward.1} parent=1 // pred_check_branch
      %16 = sbr.rel (0) target = $region9
    $region8: #{ss_linear_block_forward.1} parent=1 // pred_region
      _
    $region9: #{ss_linear_block_forward.1} parent=1 // pred_fallthru
      _
    // Predicated region
    $region10: #{ss_linear_block_forward.1} parent=1 // pred_check
      _
    $region11: #{ss_linear_block_forward.1} parent=1 // pred_check_branch
      %18 = sbr.rel (0) target = $region13
    $region12: #{ss_linear_block_forward.1} parent=1 // pred_region
      _
    $region13: #{ss_linear_block_forward.1} parent=1 // pred_fallthru
      _
    // Predicated region
    $region14: #{ss_linear_block_forward.1} parent=1 // pred_check
      _
    $region15: #{ss_linear_block_forward.1} parent=1 // pred_check_branch
      %20 = sbr.rel (0) target = $region17
    $region16: #{ss_linear_block_forward.1} parent=1 // pred_region
      _
    $region17: #{ss_linear_block_forward.1} parent=1 // pred_fallthru
      _
    // Predicated region
    $region18: #{ss_linear_block_forward.1} parent=1 // pred_check
      _
    $region19: #{ss_linear_block_forward.1} parent=1 // pred_check_branch
      %22 = sbr.rel (0) target = $region21
    $region20: #{ss_linear_block_forward.1} parent=1 // pred_region
      _
    $region21: #{ss_linear_block_forward.1} parent=1 // pred_fallthru
      _
    // Predicated region
    $region22: #{ss_linear_block_forward.1} parent=1 // pred_check
      _
    $region23: #{ss_linear_block_forward.1} parent=1 // pred_check_branch
      %24 = sbr.rel (0) target = $region25
    $region24: #{ss_linear_block_forward.1} parent=1 // pred_region
      %26 = vsyncadd [#allocation3], 0
      %s27 = sshll.u32 %s5, 4
      %s28 = int_to_ptr.hbm [resolvable:$true] %s27
      %s29 = sshll.u32 [#allocation2], 4
      %s30 = int_to_ptr.vmem [resolvable:$true] %s29
      %35 = dma.hbm_to_vmem [thread:$0]  %s28, 512, %s30, [#allocation3], 128, 128, 8
    $region25: #{ss_linear_block_forward.1} parent=1 // pred_fallthru
      _
    // Predicated region
    $region26: #{ss_linear_block_forward.1} parent=1 // pred_check
      _
    $region27: #{ss_linear_block_forward.1} parent=1 // pred_check_branch
      %37 = sbr.rel (0) target = $region29
    $region28: #{ss_linear_block_forward.1} parent=1 // pred_region
      %39 = dma.done [#allocation3], 512
    $region29: #{ss_linear_block_forward.1} parent=1 // pred_fallthru
      _
    %v40 = vld [vmem:[%s0] sm:$0xf]
    %v41 = vld [vmem:[%s1] sm:$0xf]
    %v42 = vld [vmem:[%s2] sm:$0x3f]
    %vm43 = vcmask 257024
    %v44 = vsel %vm43, %v40, 0.0
    %v45 = vrot.slane %v44, 4
    %v46 = vadd.f32 %v44, %v45
    %v47 = vrot.slane %v46, 2
    %v48 = vadd.f32 %v46, %v47
    %v49 = vrot.slane %v48, 1
    %v50 = vadd.f32 %v48, %v49
    %v51 = vrcp.pop 4.0
    %v52 = vmul.f32 4.0, %v51
    %v53 = vsub.f32 1.0, %v52
    %v54 = vmul.f32 %v51, %v53
    %v55 = vadd.f32 %v51, %v54
    %vm56 = vweird.f32 %v51
    %v57 = vsel %vm56, %v51, %v55
    %v58 = vmul.f32 %v50, %v57
    %v59 = vsub.f32 %v40, %v58
    %v60 = vmul.f32 %v59, %v59
    %v61 = vsel %vm43, %v60, 0.0
    %v62 = vrot.slane %v61, 4
    %v63 = vadd.f32 %v61, %v62
    %v64 = vrot.slane %v63, 2
    %v65 = vadd.f32 %v63, %v64
    %v66 = vrot.slane %v65, 1
    %v67 = vadd.f32 %v65, %v66
    %v68 = vmul.f32 %v67, %v57
    %v69 = vadd.f32 %v68, 1e-05
    %v70 = vrsqrt.pop %v69
    %v71 = vmul.f32 %v70, %v69
    %v72 = vmul.f32 %v71, %v70
    %v73 = vmul.f32 0.5, %v72
    %v74 = vsub.f32 1.5, %v73
    %v75 = vmul.f32 %v70, %v74
    %vm76 = vweird.f32 %v69
    %vm77 = vweird.f32 %v70
    %vm78 = vmor %vm76, %vm77
    %v79 = vsel %vm78, %v70, %v75
    %v80 = vmul.f32 %v79, %v42
    %v81 = vperm.slane %v80, 0
    %v82 = vmul.f32 %v59, %v81
    %v83 = vperm.slane %v42, 1
    %v84 = vadd.f32 %v82, %v83
    %v85 = vsel %vm43, %v41, 0.0
    %v86 = vrot.slane %v85, 4
    %v87 = vadd.f32 %v85, %v86
    %v88 = vrot.slane %v87, 2
    %v89 = vadd.f32 %v87, %v88
    %v90 = vrot.slane %v89, 1
    %v91 = vadd.f32 %v89, %v90
    %v92 = vmul.f32 %v91, %v57
    %v93 = vsub.f32 %v41, %v92
    %v94 = vmul.f32 %v93, %v93
    %v95 = vsel %vm43, %v94, 0.0
    %v96 = vrot.slane %v95, 4
    %v97 = vadd.f32 %v95, %v96
    %v98 = vrot.slane %v97, 2
    %v99 = vadd.f32 %v97, %v98
    %v100 = vrot.slane %v99, 1
    %v101 = vadd.f32 %v99, %v100
    %v102 = vmul.f32 %v101, %v57
    %v103 = vadd.f32 %v102, 1e-05
    %v104 = vrsqrt.pop %v103
    %v105 = vmul.f32 %v104, %v103
    %v106 = vmul.f32 %v105, %v104
    %v107 = vmul.f32 0.5, %v106
    %v108 = vsub.f32 1.5, %v107
    %v109 = vmul.f32 %v104, %v108
    %vm110 = vweird.f32 %v103
    %vm111 = vweird.f32 %v104
    %vm112 = vmor %vm110, %vm111
    %v113 = vsel %vm112, %v104, %v109
    %v114 = vmul.f32 %v113, %v42
    %v115 = vperm.slane %v114, 2
    %v116 = vmul.f32 %v93, %v115
    %v117 = vperm.slane %v42, 3
    %v118 = vadd.f32 %v116, %v117
    %v119 = vadd.f32 %v84, %v118
    %v120 = vld [vmem:[%s4] sm:$0xff]
    %v121 = vld [vmem:[%s4 + $0x8] sm:$0xff]
    %v122 = vld [vmem:[%s4 + $0x10] sm:$0xff]
    %v123 = vld [vmem:[%s4 + $0x18] sm:$0xff]
    %v124 = vperm.slane %v42, 4
    %vm125 = vcmask 261120
    %v127 = vsel %vm125, %v119, 0
    %129 = vmatpush.msra.mxu0 0.0
    %130 = vmatpush.msra.mxu0 0.0
    %131 = vmatpush.msra.mxu0 0.0
    %132 = vmatpush.msra.mxu0 0.0
    %133 = vmatpush.msra.mxu0 0.0
    %134 = vmatpush.msra.mxu0 0.0
    %135 = vmatpush.msra.mxu0 0.0
    %136 = vmatpush.msra.mxu0 0.0
    %137 = vmatpush.msra.mxu0 0.0
    %138 = vmatpush.msra.mxu0 0.0
    %139 = vmatpush.msra.mxu0 0.0
    %140 = vmatpush.msra.mxu0 0.0
    %141 = vmatpush.msra.mxu0 %v123
    %142 = vmatpush.msra.mxu0 %v122
    %143 = vmatpush.msra.mxu0 %v121
    %144 = vmatpush.msra.mxu0 %v120
    %145 = vmatmul.f32.gmra.mxu0 %v127
    %v146 = vpop.f32.mrf.mxu0
    %v147 = vadd.f32 %v124, %v146
    %148 = vdwg.mxu0
    %v149 = vmax.f32 %v147, 0.0
    %v150 = vld [vmem:[#allocation2] sm:$0xff]
    %v151 = vld [vmem:[#allocation2 + $0x8] sm:$0xff]
    %v152 = vld [vmem:[#allocation2 + $0x10] sm:$0xff]
    %v153 = vld [vmem:[#allocation2 + $0x18] sm:$0xff]
    %v154 = vld [vmem:[%s3] sm:$0x1]
    %v156 = vperm.slane %v154, 0
    %v159 = vsel %vm125, %v149, 0
    %161 = vmatpush.msra.mxu0 0.0
    %162 = vmatpush.msra.mxu0 0.0
    %163 = vmatpush.msra.mxu0 0.0
    %164 = vmatpush.msra.mxu0 0.0
    %165 = vmatpush.msra.mxu0 0.0
    %166 = vmatpush.msra.mxu0 0.0
    %167 = vmatpush.msra.mxu0 0.0
    %168 = vmatpush.msra.mxu0 0.0
    %169 = vmatpush.msra.mxu0 0.0
    %170 = vmatpush.msra.mxu0 0.0
    %171 = vmatpush.msra.mxu0 0.0
    %172 = vmatpush.msra.mxu0 0.0
    %173 = vmatpush.msra.mxu0 %v153
    %174 = vmatpush.msra.mxu0 %v152
    %175 = vmatpush.msra.mxu0 %v151
    %176 = vmatpush.msra.mxu0 %v150
    %177 = vmatmul.f32.gmra.mxu0 %v159
    %v178 = vpop.f32.mrf.mxu0
    %v179 = vadd.f32 %v156, %v178
    %180 = vdwg.mxu0
    %181 = vst [vmem:[#allocation5] sm:$0xf] %v179
    // Predicated region
    $region30: #{ss_linear_block_forward.1} parent=1 // pred_check
      _
    $region31: #{ss_linear_block_forward.1} parent=1 // pred_check_branch
      %183 = sbr.rel (0) target = $region33
    $region32: #{ss_linear_block_forward.1} parent=1 // pred_region
      %185 = vsyncadd [#allocation4], 0
      %s187 = sshll.u32 [#allocation5], 4
      %s188 = int_to_ptr.vmem [resolvable:$true] %s187
      %s189 = sshll.u32 %s6, 4
      %s190 = int_to_ptr.hbm [resolvable:$true] %s189
      %192 = dma.vmem_to_hbm [thread:$0]  %s188, 64, %s190, [#allocation4]
    $region33: #{ss_linear_block_forward.1} parent=1 // pred_fallthru
      _
    // Predicated region
    $region34: #{ss_linear_block_forward.1} parent=1 // pred_check
      _
    $region35: #{ss_linear_block_forward.1} parent=1 // pred_check_branch
      %194 = sbr.rel (0) target = $region37
    $region36: #{ss_linear_block_forward.1} parent=1 // pred_region
      %196 = dma.done [#allocation4], 64
    $region37: #{ss_linear_block_forward.1} parent=1 // pred_fallthru
      _
    %197 = vsyncpa [#allocation3], 1
    %198 = vsyncpa [#allocation4], 1

</llo_original>
